<compile_context>
chip_gen: v5e
topology: v5e:2x2
jax: 0.10.0
libtpu: 0.0.40
codegen_flags: <defaults>
</compile_context>

<pallas_src>
import jax
import jax.numpy as jnp
from jax.experimental import pallas as pl
from jax.experimental.pallas import tpu as pltpu

LANE = 128
TILE_ND_CAP = 512
TILE_NS_CAP = 512


def _round_up(x, m):
    return ((x + m - 1) // m) * m


def _choose_tile(n, cap, align):
    """Return (tile, padded_n): tile is `align`-aligned, <= cap, divides padded_n."""
    n_al = _round_up(max(n, align), align)
    if n_al <= cap:
        return n_al, n_al
    return cap, _round_up(n, cap)


def _rgcn_kernel(src_idx_ref,           # scalar-prefetch (drives index_maps only)
                 invdeg_ref, a_ref, xs_ref, w_ref, xd_ref, wl_ref, b_ref,
                 o_ref):
    """grid = (nd_tiles, R, ns_tiles); output tile accumulates over (R, ns)."""
    del src_idx_ref
    r = pl.program_id(1)
    k = pl.program_id(2)

    @pl.when((r == 0) & (k == 0))
    def _():
        o_ref[...] = jnp.zeros_like(o_ref)

    # Reordered contraction: the small (tile_ns, F_out) product first, so the big
    # A matmul costs Nd*Ns*F_out flops and its intermediate stays small in vregs.
    xw = jnp.dot(xs_ref[...], w_ref[...], preferred_element_type=jnp.float32)
    msg = jnp.dot(a_ref[...], xw.astype(a_ref.dtype),
                  preferred_element_type=jnp.float32)
    # DGL norm='right': per-relation, per-dst-row 1/in-degree scaling (VPU, free slot).
    o_ref[...] += invdeg_ref[...] * msg

    @pl.when((r == pl.num_programs(1) - 1) & (k == pl.num_programs(2) - 1))
    def _():
        loop = jnp.dot(xd_ref[...], wl_ref[...],
                       preferred_element_type=jnp.float32) + b_ref[...]
        o_ref[...] = jnp.maximum(o_ref[...] + loop, 0.0)   # activation = ReLU


def rel_graph_conv_dst(src_idx, invdeg, a_stack, feats_all, w_stack,
                       x_dst, w_loop, b_loop, *, tile_nd, tile_ns, n_dst, f_out):
    """Fused RGCN update for one destination node type.

    src_idx:   (R,) int32        index of each relation's source ntype in feats_all
    invdeg:    (R, Nd_p, 1) f32  per-relation 1/in-degree (rows padded with 1)
    a_stack:   (R, Nd_p, Ns_p) bf16  raw 0/1 adjacencies (zero-padded)
    feats_all: (n_ntypes, Ns_p, F_in_p) bf16  shared source-feature stack
    w_stack:   (R, F_in_p, F_out_p) bf16
    x_dst:     (Nd_p, F_in_p) f32; w_loop: (F_in_p, F_out_p) f32; b_loop: (1, F_out_p) f32
    """
    R, nd_p, ns_p = a_stack.shape
    f_in_p = feats_all.shape[-1]
    f_out_p = w_stack.shape[-1]
    grid = (nd_p // tile_nd, R, ns_p // tile_ns)

    flops = int(2 * grid[0] * R * grid[2]
                * (tile_ns * f_in_p * f_out_p + tile_nd * tile_ns * f_out_p)
                + 2 * nd_p * f_in_p * f_out_p)
    bytes_accessed = int(a_stack.size * a_stack.dtype.itemsize
                         + feats_all.size * feats_all.dtype.itemsize
                         + w_stack.size * w_stack.dtype.itemsize
                         + invdeg.size * 4 + x_dst.size * 4
                         + w_loop.size * 4 + b_loop.size * 4
                         + nd_p * f_out_p * 4)

    out_p = pl.pallas_call(
        _rgcn_kernel,
        out_shape=jax.ShapeDtypeStruct((nd_p, f_out_p), jnp.float32),
        grid_spec=pltpu.PrefetchScalarGridSpec(
            num_scalar_prefetch=1,
            grid=grid,
            in_specs=[
                # 1/deg: (R, Nd_p, 1)
                pl.BlockSpec((None, tile_nd, 1), lambda i, r, k, s: (r, i, 0)),
                # adjacency tiles: (R, Nd_p, Ns_p)
                pl.BlockSpec((None, tile_nd, tile_ns), lambda i, r, k, s: (r, i, k)),
                # shared source features, indexed by scalar-prefetch table
                pl.BlockSpec((None, tile_ns, f_in_p), lambda i, r, k, s: (s[r], k, 0)),
                # per-relation weights
                pl.BlockSpec((None, f_in_p, f_out_p), lambda i, r, k, s: (r, 0, 0)),
                # self-loop inputs (resident across the reduction axes)
                pl.BlockSpec((tile_nd, f_in_p), lambda i, r, k, s: (i, 0)),
                pl.BlockSpec((f_in_p, f_out_p), lambda i, r, k, s: (0, 0)),
                pl.BlockSpec((1, f_out_p), lambda i, r, k, s: (0, 0)),
            ],
            out_specs=pl.BlockSpec((tile_nd, f_out_p), lambda i, r, k, s: (i, 0)),
        ),
        compiler_params=pltpu.CompilerParams(
            dimension_semantics=("parallel", "arbitrary", "arbitrary")),
        cost_estimate=pl.CostEstimate(flops=flops, transcendentals=0,
                                      bytes_accessed=bytes_accessed),
    )(src_idx, invdeg, a_stack, feats_all, w_stack, x_dst, w_loop, b_loop)
    return out_p[:n_dst, :f_out]


def rel_graph_conv_layer(rel_triples, adjs, feats, rel_w, loop_w, loop_b):
    """Full RelGraphConvLayer.forward over all dst node types.

    rel_triples: list of (src_ntype, rel_name, dst_ntype)
    adjs:  dict rel_name -> (N_dst, N_src) 0/1 adjacency
    feats: dict ntype -> (N, F_in)
    rel_w: dict rel_name -> (F_in, F_out)   (== nn.Linear.weight.T)
    loop_w: dict ntype -> (F_in, F_out), loop_b: dict ntype -> (1, F_out)
    """
    ntypes = sorted(feats.keys())
    nt_index = {nt: i for i, nt in enumerate(ntypes)}
    f_in = next(iter(feats.values())).shape[1]
    f_out = next(iter(rel_w.values())).shape[1]
    f_in_p = _round_up(f_in, LANE)
    f_out_p = _round_up(f_out, LANE)

    n_max = max(f.shape[0] for f in feats.values())
    tile_ns, ns_p = _choose_tile(n_max, TILE_NS_CAP, LANE)

    # One shared bf16 source-feature stack; relations reference it via scalar prefetch.
    feats_all = jnp.stack([
        jnp.pad(feats[nt].astype(jnp.bfloat16),
                ((0, ns_p - feats[nt].shape[0]), (0, f_in_p - f_in)))
        for nt in ntypes])

    out = {}
    for nt in sorted({d for (_, _, d) in rel_triples}):
        rels = [(s, r, d) for (s, r, d) in rel_triples if d == nt]
        n_dst = feats[nt].shape[0]
        tile_nd, nd_p = _choose_tile(n_dst, TILE_ND_CAP, 8)

        a_list, inv_list = [], []
        for (s, r, _) in rels:
            adj = adjs[r].astype(jnp.float32)            # (n_dst, n_src), 0/1
            deg = jnp.clip(adj.sum(axis=1, keepdims=True), 1.0, None)
            a_list.append(jnp.pad(adj.astype(jnp.bfloat16),
                                  ((0, nd_p - adj.shape[0]),
                                   (0, ns_p - adj.shape[1]))))
            inv_list.append(jnp.pad(1.0 / deg,
                                    ((0, nd_p - adj.shape[0]), (0, 0)),
                                    constant_values=1.0))
        a_stack = jnp.stack(a_list)                      # (R, nd_p, ns_p) bf16
        invdeg = jnp.stack(inv_list)                     # (R, nd_p, 1)    f32
        w_stack = jnp.stack([
            jnp.pad(rel_w[r], ((0, f_in_p - f_in), (0, f_out_p - f_out)))
            for (_, r, _) in rels]).astype(jnp.bfloat16)
        src_idx = jnp.asarray([nt_index[s] for (s, _, _) in rels], jnp.int32)

        x_dst = jnp.pad(feats[nt], ((0, nd_p - n_dst), (0, f_in_p - f_in)))
        wl = jnp.pad(loop_w[nt], ((0, f_in_p - f_in), (0, f_out_p - f_out)))
        bl = jnp.pad(loop_b[nt], ((0, 0), (0, f_out_p - f_out)))

        out[nt] = rel_graph_conv_dst(src_idx, invdeg, a_stack, feats_all, w_stack,
                                     x_dst, wl, bl,
                                     tile_nd=tile_nd, tile_ns=tile_ns,
                                     n_dst=n_dst, f_out=f_out)
    return out


def _right_normalize(adj):
    deg = jnp.clip(adj.sum(axis=1, keepdims=True), 1.0, None)
    return adj / deg


def reference(rel_triples, adjs, feats, rel_w, loop_w, loop_b):
    out = {}
    for nt in sorted({d for (_, _, d) in rel_triples}):
        acc = feats[nt] @ loop_w[nt] + loop_b[nt]
        for (s, r, d) in rel_triples:
            if d == nt:
                acc = acc + (_right_normalize(adjs[r]) @ feats[s]) @ rel_w[r]
        out[nt] = jnp.maximum(acc, 0.0)
    return out


if __name__ == "__main__":
    key = jax.random.PRNGKey(0)

    # Synthetic heterograph: 2 node types, 3 relation types.
    ntypes = ["item", "user"]
    rel_triples = [
        ("user", "follows", "user"),
        ("user", "buys", "item"),
        ("item", "liked-by", "user"),
    ]
    n_nodes = {"user": 16, "item": 16}
    in_feat, out_feat = 32, 32

    keys = jax.random.split(key, 16)
    kiter = iter(keys)

    feats = {nt: jax.random.normal(next(kiter), (n_nodes[nt], in_feat),
                                   dtype=jnp.float32) for nt in ntypes}
    adjs = {r: (jax.random.uniform(next(kiter), (n_nodes[d], n_nodes[s])) < 0.3
                ).astype(jnp.float32) for (s, r, d) in rel_triples}
    rel_w = {r: 0.1 * jax.random.normal(next(kiter), (in_feat, out_feat),
                                        dtype=jnp.float32)
             for (_, r, _) in rel_triples}
    loop_w = {nt: 0.1 * jax.random.normal(next(kiter), (in_feat, out_feat),
                                          dtype=jnp.float32) for nt in ntypes}
    loop_b = {nt: 0.1 * jax.random.normal(next(kiter), (1, out_feat),
                                          dtype=jnp.float32) for nt in ntypes}

    out = rel_graph_conv_layer(rel_triples, adjs, feats, rel_w, loop_w, loop_b)
    out = jax.tree_util.tree_map(jax.block_until_ready, out)

    ref = reference(rel_triples, adjs, feats, rel_w, loop_w, loop_b)
    for nt in out:
        assert out[nt].shape == (n_nodes[nt], out_feat)
        # bf16 inputs / f32 accumulation -> slightly looser tolerance than pure f32
        assert jnp.allclose(out[nt], ref[nt], atol=2e-2, rtol=2e-2), nt

    print("KERNEL_OK")
</pallas_src>

<mosaic_0001>
module attributes {stable_mosaic.version = 11 : i64} {
  func.func @_rgcn_kernel(%arg0: i32, %arg1: i32, %arg2: i32, %arg3: memref<1xi32, #tpu.memory_space<smem>>, %arg4: memref<1x16x1xf32, #tpu.memory_space<vmem>>, %arg5: memref<1x16x128xbf16, #tpu.memory_space<vmem>>, %arg6: memref<1x128x128xbf16, #tpu.memory_space<vmem>>, %arg7: memref<1x128x128xbf16, #tpu.memory_space<vmem>>, %arg8: memref<16x128xf32, #tpu.memory_space<vmem>>, %arg9: memref<128x128xf32, #tpu.memory_space<vmem>>, %arg10: memref<1x128xf32, #tpu.memory_space<vmem>>, %arg11: memref<16x128xf32, #tpu.memory_space<vmem>>) attributes {dimension_semantics = [#tpu.dimension_semantics<parallel>, #tpu.dimension_semantics<arbitrary>, #tpu.dimension_semantics<arbitrary>], iteration_bounds = array<i64: 1, 1, 1>, scalar_prefetch = 1 : i64, scratch_operands = 0 : i64, tpu.core_type = #tpu.core_type<tc>, window_params = [{transform_indices = @transform_0, window_bounds = array<i64: 1, 16, 1>}, {transform_indices = @transform_1, window_bounds = array<i64: 1, 16, 128>}, {transform_indices = @transform_2, window_bounds = array<i64: 1, 128, 128>}, {transform_indices = @transform_3, window_bounds = array<i64: 1, 128, 128>}, {transform_indices = @transform_4, window_bounds = array<i64: 16, 128>}, {pipeline_mode = #tpu.pipeline_mode<synchronous>, transform_indices = @transform_5, window_bounds = array<i64: 128, 128>}, {pipeline_mode = #tpu.pipeline_mode<synchronous>, transform_indices = @transform_6, window_bounds = array<i64: 1, 128>}, {transform_indices = @transform_7, window_bounds = array<i64: 16, 128>}]} {
    %c0_i32 = arith.constant 0 : i32
    %0 = arith.cmpi eq, %arg1, %c0_i32 : i32
    %c0_i32_0 = arith.constant 0 : i32
    %1 = arith.cmpi eq, %arg2, %c0_i32_0 : i32
    %2 = arith.andi %0, %1 : i1
    %3 = arith.extui %2 : i1 to i32
    %c0_i32_1 = arith.constant 0 : i32
    %4 = arith.cmpi ne, %3, %c0_i32_1 : i32
    scf.if %4 {
      %cst_21 = arith.constant 0.000000e+00 : f32
      %26 = vector.broadcast %cst_21 : f32 to vector<16x128xf32>
      %c0_22 = arith.constant 0 : index
      %c0_23 = arith.constant 0 : index
      %27 = vector.load %arg11[%c0_22, %c0_23] : memref<16x128xf32, #tpu.memory_space<vmem>>, vector<16x128xf32>
      tpu.vector_store %arg11[%c0_22, %c0_23], %26 {strides = array<i32>} : memref<16x128xf32, #tpu.memory_space<vmem>>, vector<16x128xf32>,
    } else {
    }
    %c0 = arith.constant 0 : index
    %c0_2 = arith.constant 0 : index
    %c0_3 = arith.constant 0 : index
    %5 = vector.load %arg6[%c0, %c0_2, %c0_3] : memref<1x128x128xbf16, #tpu.memory_space<vmem>>, vector<1x128x128xbf16>
    %6 = vector.shape_cast %5 : vector<1x128x128xbf16> to vector<128x128xbf16>
    %c0_4 = arith.constant 0 : index
    %c0_5 = arith.constant 0 : index
    %c0_6 = arith.constant 0 : index
    %7 = vector.load %arg7[%c0_4, %c0_5, %c0_6] : memref<1x128x128xbf16, #tpu.memory_space<vmem>>, vector<1x128x128xbf16>
    %8 = vector.shape_cast %7 : vector<1x128x128xbf16> to vector<128x128xbf16>
    %cst = arith.constant dense<0.000000e+00> : vector<128x128xf32>
    %9 = tpu.matmul %6, %8, %cst {dimension_numbers = #tpu.dot_dimension_numbers<[1], [0], [0], [1], [0, 0, 1, 1], [], []>} : vector<128x128xbf16>, vector<128x128xbf16>, vector<128x128xf32> -> vector<128x128xf32>
    %c0_7 = arith.constant 0 : index
    %c0_8 = arith.constant 0 : index
    %c0_9 = arith.constant 0 : index
    %10 = vector.load %arg5[%c0_7, %c0_8, %c0_9] : memref<1x16x128xbf16, #tpu.memory_space<vmem>>, vector<1x16x128xbf16>
    %11 = vector.shape_cast %10 : vector<1x16x128xbf16> to vector<16x128xbf16>
    %12 = arith.truncf %9 : vector<128x128xf32> to vector<128x128xbf16>
    %cst_10 = arith.constant dense<0.000000e+00> : vector<16x128xf32>
    %13 = tpu.matmul %11, %12, %cst_10 {dimension_numbers = #tpu.dot_dimension_numbers<[1], [0], [0], [1], [0, 0, 1, 1], [], []>} : vector<16x128xbf16>, vector<128x128xbf16>, vector<16x128xf32> -> vector<16x128xf32>
    %c0_11 = arith.constant 0 : index
    %c0_12 = arith.constant 0 : index
    %14 = vector.load %arg11[%c0_11, %c0_12] : memref<16x128xf32, #tpu.memory_space<vmem>>, vector<16x128xf32>
    %c0_13 = arith.constant 0 : index
    %c0_14 = arith.constant 0 : index
    %c0_15 = arith.constant 0 : index
    %15 = vector.load %arg4[%c0_13, %c0_14, %c0_15] : memref<1x16x1xf32, #tpu.memory_space<vmem>>, vector<1x16x1xf32>
    %16 = vector.shape_cast %15 : vector<1x16x1xf32> to vector<16x1xf32>
    %17 = vector.broadcast %16 : vector<16x1xf32> to vector<16x128xf32>
    %18 = arith.mulf %17, %13 : vector<16x128xf32>
    %19 = arith.addf %14, %18 : vector<16x128xf32>
    %c0_16 = arith.constant 0 : index
    %c0_17 = arith.constant 0 : index
    %20 = vector.load %arg11[%c0_16, %c0_17] : memref<16x128xf32, #tpu.memory_space<vmem>>, vector<16x128xf32>
    tpu.vector_store %arg11[%c0_16, %c0_17], %19 {strides = array<i32>} : memref<16x128xf32, #tpu.memory_space<vmem>>, vector<16x128xf32>,
    %c0_i32_18 = arith.constant 0 : i32
    %21 = arith.cmpi eq, %arg1, %c0_i32_18 : i32
    %c0_i32_19 = arith.constant 0 : i32
    %22 = arith.cmpi eq, %arg2, %c0_i32_19 : i32
    %23 = arith.andi %21, %22 : i1
    %24 = arith.extui %23 : i1 to i32
    %c0_i32_20 = arith.constant 0 : i32
    %25 = arith.cmpi ne, %24, %c0_i32_20 : i32
    scf.if %25 {
      %c0_21 = arith.constant 0 : index
      %c0_22 = arith.constant 0 : index
      %26 = vector.load %arg8[%c0_21, %c0_22] : memref<16x128xf32, #tpu.memory_space<vmem>>, vector<16x128xf32>
      %c0_23 = arith.constant 0 : index
      %c0_24 = arith.constant 0 : index
      %27 = vector.load %arg9[%c0_23, %c0_24] : memref<128x128xf32, #tpu.memory_space<vmem>>, vector<128x128xf32>
      %cst_25 = arith.constant dense<0.000000e+00> : vector<16x128xf32>
      %28 = tpu.matmul %26, %27, %cst_25 {dimension_numbers = #tpu.dot_dimension_numbers<[1], [0], [0], [1], [0, 0, 1, 1], [], []>} : vector<16x128xf32>, vector<128x128xf32>, vector<16x128xf32> -> vector<16x128xf32>
      %c0_26 = arith.constant 0 : index
      %c0_27 = arith.constant 0 : index
      %29 = vector.load %arg10[%c0_26, %c0_27] : memref<1x128xf32, #tpu.memory_space<vmem>>, vector<1x128xf32>
      %30 = vector.broadcast %29 : vector<1x128xf32> to vector<16x128xf32>
      %31 = arith.addf %28, %30 : vector<16x128xf32>
      %c0_28 = arith.constant 0 : index
      %c0_29 = arith.constant 0 : index
      %32 = vector.load %arg11[%c0_28, %c0_29] : memref<16x128xf32, #tpu.memory_space<vmem>>, vector<16x128xf32>
      %33 = arith.addf %32, %31 : vector<16x128xf32>
      %cst_30 = arith.constant 0.000000e+00 : f32
      %34 = vector.broadcast %cst_30 : f32 to vector<16x128xf32>
      %35 = arith.maximumf %33, %34 : vector<16x128xf32>
      %c0_31 = arith.constant 0 : index
      %c0_32 = arith.constant 0 : index
      %36 = vector.load %arg11[%c0_31, %c0_32] : memref<16x128xf32, #tpu.memory_space<vmem>>, vector<16x128xf32>
      tpu.vector_store %arg11[%c0_31, %c0_32], %35 {strides = array<i32>} : memref<16x128xf32, #tpu.memory_space<vmem>>, vector<16x128xf32>,
    } else {
    }
    return
  }
  func.func @transform_0(%arg0: i32, %arg1: i32, %arg2: i32, %arg3: memref<1xi32, #tpu.memory_space<smem>>) -> (i32, i32, i32) {
    %c0_i32 = arith.constant 0 : i32
    %c0_i32_0 = arith.constant 0 : i32
    return %arg1, %arg0, %c0_i32 : i32, i32, i32
  }
  func.func @transform_1(%arg0: i32, %arg1: i32, %arg2: i32, %arg3: memref<1xi32, #tpu.memory_space<smem>>) -> (i32, i32, i32) {
    %c0_i32 = arith.constant 0 : i32
    return %arg1, %arg0, %arg2 : i32, i32, i32
  }
  func.func @transform_2(%arg0: i32, %arg1: i32, %arg2: i32, %arg3: memref<1xi32, #tpu.memory_space<smem>>) -> (i32, i32, i32) {
    %0 = arith.index_cast %arg1 : i32 to index
    %1 = memref.load %arg3[%0] : memref<1xi32, #tpu.memory_space<smem>>
    %c0_i32 = arith.constant 0 : i32
    %c0_i32_0 = arith.constant 0 : i32
    return %1, %arg2, %c0_i32 : i32, i32, i32
  }
  func.func @transform_3(%arg0: i32, %arg1: i32, %arg2: i32, %arg3: memref<1xi32, #tpu.memory_space<smem>>) -> (i32, i32, i32) {
    %c0_i32 = arith.constant 0 : i32
    %c0_i32_0 = arith.constant 0 : i32
    %c0_i32_1 = arith.constant 0 : i32
    return %arg1, %c0_i32, %c0_i32_0 : i32, i32, i32
  }
  func.func @transform_4(%arg0: i32, %arg1: i32, %arg2: i32, %arg3: memref<1xi32, #tpu.memory_space<smem>>) -> (i32, i32) {
    %c0_i32 = arith.constant 0 : i32
    %c0_i32_0 = arith.constant 0 : i32
    return %arg0, %c0_i32 : i32, i32
  }
  func.func @transform_5(%arg0: i32, %arg1: i32, %arg2: i32, %arg3: memref<1xi32, #tpu.memory_space<smem>>) -> (i32, i32) {
    %c0_i32 = arith.constant 0 : i32
    %c0_i32_0 = arith.constant 0 : i32
    %c0_i32_1 = arith.constant 0 : i32
    return %c0_i32, %c0_i32_0 : i32, i32
  }
  func.func @transform_6(%arg0: i32, %arg1: i32, %arg2: i32, %arg3: memref<1xi32, #tpu.memory_space<smem>>) -> (i32, i32) {
    %c0_i32 = arith.constant 0 : i32
    %c0_i32_0 = arith.constant 0 : i32
    %c0_i32_1 = arith.constant 0 : i32
    return %c0_i32, %c0_i32_0 : i32, i32
  }
  func.func @transform_7(%arg0: i32, %arg1: i32, %arg2: i32, %arg3: memref<1xi32, #tpu.memory_space<smem>>) -> (i32, i32) {
    %c0_i32 = arith.constant 0 : i32
    %c0_i32_0 = arith.constant 0 : i32
    return %arg0, %c0_i32 : i32, i32
  }
}

</mosaic_0001>

<llo_original>
// kernel: tpu_custom_call.1
$region0: #{tpu_custom_call.1}
  #allocation0 [shape = 'u32[]', space=smem, size = 0x4, offset = 0x4, fixed_abs, tag = 'smem constant byte address 0x4 - core index']
  #allocation1 [shape = 'u32[72,128]{1,0:T(1,128)}', space=vmem, size = 0x9000, scoped, tag = 'internal scratch']
  #allocation2 [shape = 's32[1]{0}', space=sflag, size = 0x4, scoped, tag = 'scoped memory for tpu_custom_call.1']
  #allocation3 [shape = 's32[1]{0:T(128)S(6)}', space=smem, size = 0x200, scoped, tag = 'prefetched SMEM operand 0']
  %s0 = inlined_call_operand.<no memory space> [shape: s32[1], index: 0, kind: input, shape index: {}]
  %s1 = inlined_call_operand.vmem [shape: f32[1,16,1], index: 1, kind: input, shape index: {}]
  %s2 = inlined_call_operand.hbm [shape: bf16[1,16,128], index: 2, kind: input, shape index: {}]
  %s3 = inlined_call_operand.hbm [shape: bf16[2,128,128], index: 3, kind: input, shape index: {}]
  %s4 = inlined_call_operand.hbm [shape: bf16[1,128,128], index: 4, kind: input, shape index: {}]
  %s5 = inlined_call_operand.vmem [shape: f32[16,128], index: 5, kind: input, shape index: {}]
  %s6 = inlined_call_operand.hbm [shape: f32[128,128], index: 6, kind: input, shape index: {}]
  %s7 = inlined_call_operand.vmem [shape: f32[1,128], index: 7, kind: input, shape index: {}]
  %s8 = inlined_call_operand.hbm [shape: f32[16,128], index: 8, kind: output, shape index: {}]
  %s9 = sld [smem:[#allocation0]]
  $region62: #{tpu_custom_call.1} parent=0
    _
  %s11 = ssub.s32 1, %s9
  %s12 = scalar_select 0, %s11, %s9
  %13 = sst [smem:[#allocation3]] %s0
  $region1: #{tpu_custom_call.1} parent=0
    #allocation4 [shape = 'u8[4096]{0}', space=vmem, size = 0x1000, scoped, tag = 'input window, operand 2, single buffered']
    #allocation5 [shape = 's32[1]{0}', space=sflag, size = 0x4, scoped, tag = 'scoped memory for tpu_custom_call.1']
    #allocation6 [shape = 's32[1]{0}', space=sflag, size = 0x4, scoped, tag = 'scoped memory for tpu_custom_call.1']
    #allocation7 [shape = 'u8[32768]{0}', space=vmem, size = 0x8000, scoped, tag = 'input window, operand 3, single buffered']
    #allocation8 [shape = 's32[1]{0}', space=sflag, size = 0x4, scoped, tag = 'scoped memory for tpu_custom_call.1']
    #allocation9 [shape = 'u8[32768]{0}', space=vmem, size = 0x8000, scoped, tag = 'input window, operand 4, single buffered']
    #allocation10 [shape = 'u8[65536]{0}', space=vmem, size = 0x10000, scoped, tag = 'input window, operand 6, single buffered']
    #allocation11 [shape = 's32[1]{0}', space=sflag, size = 0x4, scoped, tag = 'scoped memory for tpu_custom_call.1']
    #allocation12 [shape = 'u8[8192]{0}', space=vmem, size = 0x2000, scoped, tag = 'output window, operand 0, single buffered']
    %14 = vsyncpa [#allocation5], 0
    %15 = vsyncpa [#allocation8], 0
    %16 = vsyncpa [#allocation11], 0
    %17 = vsyncpa [#allocation6], 0
    // Predicated region
    $region2: #{tpu_custom_call.1} parent=1 // pred_check
      _
    $region3: #{tpu_custom_call.1} parent=1 // pred_check_branch
      %19 = sbr.rel (0) target = $region5
    $region4: #{tpu_custom_call.1} parent=1 // pred_region
      _
    $region5: #{tpu_custom_call.1} parent=1 // pred_fallthru
      _
    // Predicated region
    $region6: #{tpu_custom_call.1} parent=1 // pred_check
      _
    $region7: #{tpu_custom_call.1} parent=1 // pred_check_branch
      %21 = sbr.rel (0) target = $region9
    $region8: #{tpu_custom_call.1} parent=1 // pred_region
      %23 = vsyncadd [#allocation5], 0
      %s24 = sshll.u32 %s2, 4
      %s25 = int_to_ptr.hbm [resolvable:$true] %s24
      %s26 = sshll.u32 [#allocation4], 4
      %s27 = int_to_ptr.vmem [resolvable:$true] %s26
      %32 = dma.hbm_to_vmem [thread:$0]  %s25, 128, %s27, [#allocation5], 64, 64, 4
    $region9: #{tpu_custom_call.1} parent=1 // pred_fallthru
      _
    // Predicated region
    $region10: #{tpu_custom_call.1} parent=1 // pred_check
      _
    $region11: #{tpu_custom_call.1} parent=1 // pred_check_branch
      %34 = sbr.rel (0) target = $region13
    $region12: #{tpu_custom_call.1} parent=1 // pred_region
      %s35 = sld [smem:[#allocation3]]
      %37 = vsyncadd [#allocation8], 0
      %s38 = smul.addr %s35, 16
      %s39 = smul.addr %s38, 4
      %s40 = scalar_lea.hbm %s3, %s39
      %s41 = sshll.u32 %s40, 4
      %s42 = int_to_ptr.hbm [resolvable:$true] %s41
      %s43 = sshll.u32 [#allocation7], 4
      %s44 = int_to_ptr.vmem [resolvable:$true] %s43
      %49 = dma.hbm_to_vmem [thread:$0]  %s42, 1024, %s44, [#allocation8], 64, 64, 4
    $region13: #{tpu_custom_call.1} parent=1 // pred_fallthru
      _
    // Predicated region
    $region14: #{tpu_custom_call.1} parent=1 // pred_check
      _
    $region15: #{tpu_custom_call.1} parent=1 // pred_check_branch
      %51 = sbr.rel (0) target = $region17
    $region16: #{tpu_custom_call.1} parent=1 // pred_region
      %53 = vsyncadd [#allocation8], 0
      %s54 = sshll.u32 %s4, 4
      %s55 = int_to_ptr.hbm [resolvable:$true] %s54
      %s56 = sshll.u32 [#allocation9], 4
      %s57 = int_to_ptr.vmem [resolvable:$true] %s56
      %62 = dma.hbm_to_vmem [thread:$0]  %s55, 1024, %s57, [#allocation8], 64, 64, 4
    $region17: #{tpu_custom_call.1} parent=1 // pred_fallthru
      _
    // Predicated region
    $region18: #{tpu_custom_call.1} parent=1 // pred_check
      _
    $region19: #{tpu_custom_call.1} parent=1 // pred_check_branch
      %64 = sbr.rel (0) target = $region21
    $region20: #{tpu_custom_call.1} parent=1 // pred_region
      _
    $region21: #{tpu_custom_call.1} parent=1 // pred_fallthru
      _
    // Predicated region
    $region22: #{tpu_custom_call.1} parent=1 // pred_check
      _
    $region23: #{tpu_custom_call.1} parent=1 // pred_check_branch
      %66 = sbr.rel (0) target = $region25
    $region24: #{tpu_custom_call.1} parent=1 // pred_region
      %68 = vsyncadd [#allocation11], 0
      %s69 = sshll.u32 %s6, 4
      %s70 = int_to_ptr.hbm [resolvable:$true] %s69
      %s71 = sshll.u32 [#allocation10], 4
      %s72 = int_to_ptr.vmem [resolvable:$true] %s71
      %77 = dma.hbm_to_vmem [thread:$0]  %s70, 2048, %s72, [#allocation11], 128, 128, 8
    $region25: #{tpu_custom_call.1} parent=1 // pred_fallthru
      _
    // Predicated region
    $region26: #{tpu_custom_call.1} parent=1 // pred_check
      _
    $region27: #{tpu_custom_call.1} parent=1 // pred_check_branch
      %79 = sbr.rel (0) target = $region29
    $region28: #{tpu_custom_call.1} parent=1 // pred_region
      _
    $region29: #{tpu_custom_call.1} parent=1 // pred_fallthru
      _
    // Predicated region
    $region30: #{tpu_custom_call.1} parent=1 // pred_check
      _
    $region31: #{tpu_custom_call.1} parent=1 // pred_check_branch
      %81 = sbr.rel (0) target = $region33
    $region32: #{tpu_custom_call.1} parent=1 // pred_region
      %83 = dma.done [#allocation5], 128
    $region33: #{tpu_custom_call.1} parent=1 // pred_fallthru
      _
    // Predicated region
    $region34: #{tpu_custom_call.1} parent=1 // pred_check
      _
    $region35: #{tpu_custom_call.1} parent=1 // pred_check_branch
      %85 = sbr.rel (0) target = $region37
    $region36: #{tpu_custom_call.1} parent=1 // pred_region
      %87 = dma.done [#allocation8], 1024
    $region37: #{tpu_custom_call.1} parent=1 // pred_fallthru
      _
    // Predicated region
    $region38: #{tpu_custom_call.1} parent=1 // pred_check
      _
    $region39: #{tpu_custom_call.1} parent=1 // pred_check_branch
      %89 = sbr.rel (0) target = $region41
    $region40: #{tpu_custom_call.1} parent=1 // pred_region
      %91 = dma.done [#allocation8], 1024
    $region41: #{tpu_custom_call.1} parent=1 // pred_fallthru
      _
    // Predicated region
    $region42: #{tpu_custom_call.1} parent=1 // pred_check
      _
    $region43: #{tpu_custom_call.1} parent=1 // pred_check_branch
      %93 = sbr.rel (0) target = $region45
    $region44: #{tpu_custom_call.1} parent=1 // pred_region
      %95 = dma.done [#allocation11], 2048
    $region45: #{tpu_custom_call.1} parent=1 // pred_fallthru
      _
    %s96 = sld [smem:[#allocation3]]
    %p97 = scmp.eq.s32.totalorder 0, 0
    %p98 = scmp.eq.s32.totalorder 0, 0
    %p99 = pnand %p97, %p98
    %p100 = pneg %p99
    // Predicated region
    $region46: #{tpu_custom_call.1} parent=1 // pred_check
      _
    $region47: #{tpu_custom_call.1} parent=1 // pred_check_branch
      %102 = sbr.rel (%p99) target = $region49
    $region48: #{tpu_custom_call.1} parent=1 // pred_region
      %103 = vst [vmem:[#allocation12] sm:$0xff] 0.0
      %104 = vst [vmem:[#allocation12 + $0x8] sm:$0xff] 0.0
    $region49: #{tpu_custom_call.1} parent=1 // pred_fallthru
      _
    %v105 = vld [vmem:[#allocation7] sm:$0xf]
    %v106 = vld [vmem:[#allocation7 + $0x4] sm:$0xf]
    %v107 = vld [vmem:[#allocation7 + $0x8] sm:$0xf]
    %v108 = vld [vmem:[#allocation7 + $0xc] sm:$0xf]
    %v109 = vld [vmem:[#allocation7 + $0x10] sm:$0xf]
    %v110 = vld [vmem:[#allocation7 + $0x14] sm:$0xf]
    %v111 = vld [vmem:[#allocation7 + $0x18] sm:$0xf]
    %v112 = vld [vmem:[#allocation7 + $0x1c] sm:$0xf]
    %v113 = vld [vmem:[#allocation7 + $0x20] sm:$0xf]
    %v114 = vld [vmem:[#allocation7 + $0x24] sm:$0xf]
    %v115 = vld [vmem:[#allocation7 + $0x28] sm:$0xf]
    %v116 = vld [vmem:[#allocation7 + $0x2c] sm:$0xf]
    %v117 = vld [vmem:[#allocation7 + $0x30] sm:$0xf]
    %v118 = vld [vmem:[#allocation7 + $0x34] sm:$0xf]
    %v119 = vld [vmem:[#allocation7 + $0x38] sm:$0xf]
    %v120 = vld [vmem:[#allocation7 + $0x3c] sm:$0xf]
    %v121 = vld [vmem:[#allocation9] sm:$0xf]
    %v122 = vld [vmem:[#allocation9 + $0x4] sm:$0xf]
    %v123 = vld [vmem:[#allocation9 + $0x8] sm:$0xf]
    %v124 = vld [vmem:[#allocation9 + $0xc] sm:$0xf]
    %v125 = vld [vmem:[#allocation9 + $0x10] sm:$0xf]
    %v126 = vld [vmem:[#allocation9 + $0x14] sm:$0xf]
    %v127 = vld [vmem:[#allocation9 + $0x18] sm:$0xf]
    %v128 = vld [vmem:[#allocation9 + $0x1c] sm:$0xf]
    %v129 = vld [vmem:[#allocation9 + $0x20] sm:$0xf]
    %v130 = vld [vmem:[#allocation9 + $0x24] sm:$0xf]
    %v131 = vld [vmem:[#allocation9 + $0x28] sm:$0xf]
    %v132 = vld [vmem:[#allocation9 + $0x2c] sm:$0xf]
    %v133 = vld [vmem:[#allocation9 + $0x30] sm:$0xf]
    %v134 = vld [vmem:[#allocation9 + $0x34] sm:$0xf]
    %v135 = vld [vmem:[#allocation9 + $0x38] sm:$0xf]
    %v136 = vld [vmem:[#allocation9 + $0x3c] sm:$0xf]
    %v153 = vunpack.c.l.b16 %v105
    %v154 = vunpack.c.l.b16 %v106
    %v155 = vunpack.c.l.b16 %v107
    %v156 = vunpack.c.l.b16 %v108
    %v157 = vunpack.c.l.b16 %v109
    %v158 = vunpack.c.l.b16 %v110
    %v159 = vunpack.c.l.b16 %v111
    %v160 = vunpack.c.l.b16 %v112
    %v161 = vunpack.c.l.b16 %v113
    %v162 = vunpack.c.l.b16 %v114
    %v163 = vunpack.c.l.b16 %v115
    %v164 = vunpack.c.l.b16 %v116
    %v165 = vunpack.c.l.b16 %v117
    %v166 = vunpack.c.l.b16 %v118
    %v167 = vunpack.c.l.b16 %v119
    %v168 = vunpack.c.l.b16 %v120
    %v169 = vpack.c.b16 %v154, %v153
    %v170 = vpack.c.b16 %v156, %v155
    %v171 = vpack.c.b16 %v158, %v157
    %v172 = vpack.c.b16 %v160, %v159
    %v173 = vpack.c.b16 %v162, %v161
    %v174 = vpack.c.b16 %v164, %v163
    %v175 = vpack.c.b16 %v166, %v165
    %v176 = vpack.c.b16 %v168, %v167
    %v201 = vunpack.c.l.b16 %v121
    %v202 = vunpack.c.l.b16 %v122
    %v203 = vunpack.c.l.b16 %v123
    %v204 = vunpack.c.l.b16 %v124
    %v205 = vunpack.c.l.b16 %v125
    %v206 = vunpack.c.l.b16 %v126
    %v207 = vunpack.c.l.b16 %v127
    %v208 = vunpack.c.l.b16 %v128
    %v209 = vunpack.c.l.b16 %v129
    %v210 = vunpack.c.l.b16 %v130
    %v211 = vunpack.c.l.b16 %v131
    %v212 = vunpack.c.l.b16 %v132
    %v213 = vunpack.c.l.b16 %v133
    %v214 = vunpack.c.l.b16 %v134
    %v215 = vunpack.c.l.b16 %v135
    %v216 = vunpack.c.l.b16 %v136
    %v217 = vpack.c.b16 %v202, %v201
    %v218 = vpack.c.b16 %v204, %v203
    %v219 = vpack.c.b16 %v206, %v205
    %v220 = vpack.c.b16 %v208, %v207
    %v221 = vpack.c.b16 %v210, %v209
    %v222 = vpack.c.b16 %v212, %v211
    %v223 = vpack.c.b16 %v214, %v213
    %v224 = vpack.c.b16 %v216, %v215
    %233 = vmatpush.bf16.msra.mxu0 %v224
    %234 = vmatpush.bf16.msra.mxu0 %v223
    %235 = vmatpush.bf16.msra.mxu0 %v222
    %236 = vmatpush.bf16.msra.mxu0 %v221
    %237 = vmatpush.bf16.msra.mxu0 %v220
    %238 = vmatpush.bf16.msra.mxu0 %v219
    %239 = vmatpush.bf16.msra.mxu0 %v218
    %240 = vmatpush.bf16.msra.mxu0 %v217
    %241 = vmatmul.bf16.gmra.mxu0 %v169
    %v242 = vpop.f32.mrf.mxu0
    %v243 = vadd.f32 0.0, %v242
    %v244 = vpop.f32.mrf.mxu0
    %v245 = vadd.f32 0.0, %v244
    %246 = vmatmul.bf16.gmra.mxu0 %v170
    %v247 = vpop.f32.mrf.mxu0
    %v248 = vadd.f32 0.0, %v247
    %v249 = vpop.f32.mrf.mxu0
    %v250 = vadd.f32 0.0, %v249
    %251 = vmatmul.bf16.gmra.mxu0 %v171
    %v252 = vpop.f32.mrf.mxu0
    %v253 = vadd.f32 0.0, %v252
    %v254 = vpop.f32.mrf.mxu0
    %v255 = vadd.f32 0.0, %v254
    %256 = vmatmul.bf16.gmra.mxu0 %v172
    %v257 = vpop.f32.mrf.mxu0
    %v258 = vadd.f32 0.0, %v257
    %v259 = vpop.f32.mrf.mxu0
    %v260 = vadd.f32 0.0, %v259
    %261 = vmatmul.bf16.gmra.mxu0 %v173
    %v262 = vpop.f32.mrf.mxu0
    %v263 = vadd.f32 0.0, %v262
    %v264 = vpop.f32.mrf.mxu0
    %v265 = vadd.f32 0.0, %v264
    %266 = vmatmul.bf16.gmra.mxu0 %v174
    %v267 = vpop.f32.mrf.mxu0
    %v268 = vadd.f32 0.0, %v267
    %v269 = vpop.f32.mrf.mxu0
    %v270 = vadd.f32 0.0, %v269
    %271 = vmatmul.bf16.gmra.mxu0 %v175
    %v272 = vpop.f32.mrf.mxu0
    %v273 = vadd.f32 0.0, %v272
    %v274 = vpop.f32.mrf.mxu0
    %v275 = vadd.f32 0.0, %v274
    %276 = vmatmul.bf16.gmra.mxu0 %v176
    %v277 = vpop.f32.mrf.mxu0
    %v278 = vadd.f32 0.0, %v277
    %v279 = vpop.f32.mrf.mxu0
    %v280 = vadd.f32 0.0, %v279
    %281 = vdwg.mxu0
    %v282 = vld [vmem:[#allocation4] sm:$0xf]
    %v283 = vld [vmem:[#allocation4 + $0x4] sm:$0xf]
    %v284 = vpack.c.bf16 %v245, %v243
    %v285 = vpack.c.bf16 %v250, %v248
    %v286 = vpack.c.bf16 %v255, %v253
    %v287 = vpack.c.bf16 %v260, %v258
    %v288 = vpack.c.bf16 %v265, %v263
    %v289 = vpack.c.bf16 %v270, %v268
    %v290 = vpack.c.bf16 %v275, %v273
    %v291 = vpack.c.bf16 %v280, %v278
    %v294 = vunpack.c.l.b16 %v282
    %v295 = vunpack.c.l.b16 %v283
    %v296 = vpack.c.b16 %v295, %v294
    %298 = vmatpush.bf16.msra.mxu0 %v291
    %299 = vmatpush.bf16.msra.mxu0 %v290
    %300 = vmatpush.bf16.msra.mxu0 %v289
    %301 = vmatpush.bf16.msra.mxu0 %v288
    %302 = vmatpush.bf16.msra.mxu0 %v287
    %303 = vmatpush.bf16.msra.mxu0 %v286
    %304 = vmatpush.bf16.msra.mxu0 %v285
    %305 = vmatpush.bf16.msra.mxu0 %v284
    %306 = vmatmul.bf16.gmra.mxu0 %v296
    %v307 = vpop.f32.mrf.mxu0
    %v308 = vadd.f32 0.0, %v307
    %v309 = vpop.f32.mrf.mxu0
    %v310 = vadd.f32 0.0, %v309
    %311 = vdwg.mxu0
    %v312 = vld [vmem:[#allocation12] sm:$0xff]
    %v313 = vld [vmem:[#allocation12 + $0x8] sm:$0xff]
    %v314 = vld [vmem:[%s1] sm:$0xff]
    %v315 = vld [vmem:[%s1 + $0x8] sm:$0xff]
    %317 = vset.pattern.permute.xlu0 0
    %318 = vperm.xlu0 %317, %v314
    %v319 = vpop.permute.xlu0 %318
    %322 = vset.pattern.permute.xlu0 0
    %323 = vperm.xlu0 %322, %v315
    %v324 = vpop.permute.xlu0 %323
    %v326 = vmul.f32 %v319, %v308
    %v327 = vmul.f32 %v324, %v310
    %v328 = vadd.f32 %v312, %v326
    %v329 = vadd.f32 %v313, %v327
    %330 = vst [vmem:[#allocation12] sm:$0xff] %v328
    %331 = vst [vmem:[#allocation12 + $0x8] sm:$0xff] %v329
    // Predicated region
    $region50: #{tpu_custom_call.1} parent=1 // pred_check
      _
    $region51: #{tpu_custom_call.1} parent=1 // pred_check_branch
      %333 = sbr.rel (%p99) target = $region53
    $region52: #{tpu_custom_call.1} parent=1 // pred_region
      %v334 = vld [vmem:[%s5] sm:$0xff]
      %v335 = vld [vmem:[%s5 + $0x8] sm:$0xff]
      %v336 = vld [vmem:[#allocation10] sm:$0xff]
      %v337 = vld [vmem:[#allocation10 + $0x8] sm:$0xff]
      %v338 = vld [vmem:[#allocation10 + $0x10] sm:$0xff]
      %v339 = vld [vmem:[#allocation10 + $0x18] sm:$0xff]
      %v340 = vld [vmem:[#allocation10 + $0x20] sm:$0xff]
      %v341 = vld [vmem:[#allocation10 + $0x28] sm:$0xff]
      %v342 = vld [vmem:[#allocation10 + $0x30] sm:$0xff]
      %v343 = vld [vmem:[#allocation10 + $0x38] sm:$0xff]
      %v344 = vld [vmem:[#allocation10 + $0x40] sm:$0xff]
      %v345 = vld [vmem:[#allocation10 + $0x48] sm:$0xff]
      %v346 = vld [vmem:[#allocation10 + $0x50] sm:$0xff]
      %v347 = vld [vmem:[#allocation10 + $0x58] sm:$0xff]
      %v348 = vld [vmem:[#allocation10 + $0x60] sm:$0xff]
      %v349 = vld [vmem:[#allocation10 + $0x68] sm:$0xff]
      %v350 = vld [vmem:[#allocation10 + $0x70] sm:$0xff]
      %v351 = vld [vmem:[#allocation10 + $0x78] sm:$0xff]
      %v352 = vld [vmem:[%s7] sm:$0x1]
      %v354 = vperm.slane %v352, 0
      %356 = vmatpush.msra.mxu0 %v351
      %357 = vmatpush.msra.mxu0 %v350
      %358 = vmatpush.msra.mxu0 %v349
      %359 = vmatpush.msra.mxu0 %v348
      %360 = vmatpush.msra.mxu0 %v347
      %361 = vmatpush.msra.mxu0 %v346
      %362 = vmatpush.msra.mxu0 %v345
      %363 = vmatpush.msra.mxu0 %v344
      %364 = vmatpush.msra.mxu0 %v343
      %365 = vmatpush.msra.mxu0 %v342
      %366 = vmatpush.msra.mxu0 %v341
      %367 = vmatpush.msra.mxu0 %v340
      %368 = vmatpush.msra.mxu0 %v339
      %369 = vmatpush.msra.mxu0 %v338
      %370 = vmatpush.msra.mxu0 %v337
      %371 = vmatpush.msra.mxu0 %v336
      %372 = vmatmul.f32.gmra.mxu0 %v334
      %v373 = vpop.f32.mrf.mxu0
      %v374 = vadd.f32 %v354, %v373
      %375 = vmatmul.f32.gmra.mxu0 %v335
      %v376 = vpop.f32.mrf.mxu0
      %v377 = vadd.f32 %v354, %v376
      %378 = vdwg.mxu0
      %v379 = vld [vmem:[#allocation12] sm:$0xff]
      %v380 = vld [vmem:[#allocation12 + $0x8] sm:$0xff]
      %v381 = vadd.f32 %v379, %v374
      %v382 = vadd.f32 %v380, %v377
      %v383 = vmax.f32 %v381, 0.0
      %v384 = vmax.f32 %v382, 0.0
      %385 = vst [vmem:[#allocation12] sm:$0xff] %v383
      %386 = vst [vmem:[#allocation12 + $0x8] sm:$0xff] %v384
    $region53: #{tpu_custom_call.1} parent=1 // pred_fallthru
      _
    // Predicated region
    $region54: #{tpu_custom_call.1} parent=1 // pred_check
      _
    $region55: #{tpu_custom_call.1} parent=1 // pred_check_branch
      %388 = sbr.rel (0) target = $region57
    $region56: #{tpu_custom_call.1} parent=1 // pred_region
      %390 = vsyncadd [#allocation6], 0
      %s391 = sshll.u32 [#allocation12], 4
      %s392 = int_to_ptr.vmem [resolvable:$true] %s391
      %s393 = sshll.u32 %s8, 4
      %s394 = int_to_ptr.hbm [resolvable:$true] %s393
      %399 = dma.vmem_to_hbm [thread:$0]  %s392, 256, %s394, [#allocation6], 128, 128, 8
    $region57: #{tpu_custom_call.1} parent=1 // pred_fallthru
      _
    // Predicated region
    $region58: #{tpu_custom_call.1} parent=1 // pred_check
      _
    $region59: #{tpu_custom_call.1} parent=1 // pred_check_branch
      %401 = sbr.rel (0) target = $region61
    $region60: #{tpu_custom_call.1} parent=1 // pred_region
      %403 = dma.done [#allocation6], 256
    $region61: #{tpu_custom_call.1} parent=1 // pred_fallthru
      _
    %404 = vsyncpa [#allocation5], 1
    %405 = vsyncpa [#allocation8], 1
    %406 = vsyncpa [#allocation11], 1
    %407 = vsyncpa [#allocation6], 1

</llo_original>
